<compile_context>
chip_gen: v5e
topology: v5e:2x2
jax: 0.10.0
libtpu: 0.0.40
codegen_flags: <defaults>
</compile_context>

<pallas_src>
import math

import jax
import jax.numpy as jnp
from jax.experimental import pallas as pl
from jax.experimental.pallas import tpu as pltpu


def _build_time_table(T: int, d_model: int) -> jnp.ndarray:
    """Sinusoidal table, identical math to the PyTorch __init__ (interleaved sin/cos)."""
    assert d_model % 2 == 0
    emb = jnp.arange(0, d_model, 2, dtype=jnp.float32) / d_model * math.log(10000.0)
    emb = jnp.exp(-emb)                                   # (d_model//2,)
    pos = jnp.arange(T, dtype=jnp.float32)                # (T,)
    ang = pos[:, None] * emb[None, :]                     # (T, d_model//2)
    table = jnp.stack([jnp.sin(ang), jnp.cos(ang)], axis=-1)   # (T, d_model//2, 2)
    return table.reshape(T, d_model)                      # (T, d_model)


def _time_embedding_kernel(t_ref, table_ref, w1_ref, b1_ref, w2_ref, b2_ref, o_ref):
    # t_ref:     (bn, 1)  int32 timestep indices for this row block
    # table_ref: (T, d_model) resident sinusoidal table
    # w1/b1/w2/b2: resident MLP params
    # o_ref:     (bn, dim)
    idx = t_ref[...]                                       # (bn, 1)
    bn = idx.shape[0]
    T = table_ref.shape[0]

    # Embedding lookup as a one-hot matmul on the MXU (robust TPU "gather").
    pos = jax.lax.broadcasted_iota(jnp.int32, (bn, T), 1)  # (bn, T)
    onehot = (pos == idx).astype(jnp.float32)              # (bn, T)
    x = jnp.dot(onehot, table_ref[...], preferred_element_type=jnp.float32)   # (bn, d_model)

    # Linear -> Swish -> Linear, fused in VMEM.
    h = jnp.dot(x, w1_ref[...], preferred_element_type=jnp.float32) + b1_ref[...]
    h = h * jax.nn.sigmoid(h)                              # Swish
    out = jnp.dot(h, w2_ref[...], preferred_element_type=jnp.float32) + b2_ref[...]
    o_ref[...] = out.astype(o_ref.dtype)


def time_embedding_forward(t, table, w1, b1, w2, b2, *, block_n: int = 256):
    """t: (n,) int32 timesteps; table: (T, d_model); w1: (d_model, dim); w2: (dim, dim)."""
    n = t.shape[0]
    T, d_model = table.shape
    dim = w2.shape[1]

    # Row tile: multiple of 8 sublanes, padded grid over all timesteps.
    bn = block_n if n >= block_n else max(8, ((n + 7) // 8) * 8)
    n_pad = ((n + bn - 1) // bn) * bn

    t2 = jnp.zeros((n_pad, 1), jnp.int32).at[:n, 0].set(t.astype(jnp.int32))
    b1_2 = b1.reshape(1, dim)
    b2_2 = b2.reshape(1, dim)

    out = pl.pallas_call(
        _time_embedding_kernel,
        out_shape=jax.ShapeDtypeStruct((n_pad, dim), jnp.float32),
        grid_spec=pltpu.PrefetchScalarGridSpec(
            num_scalar_prefetch=0,
            grid=(n_pad // bn,),
            in_specs=[
                pl.BlockSpec((bn, 1), lambda i: (i, 0)),         # per-block timestep ids
                pl.BlockSpec((T, d_model), lambda i: (0, 0)),    # resident sinusoidal table
                pl.BlockSpec((d_model, dim), lambda i: (0, 0)),  # resident W1
                pl.BlockSpec((1, dim), lambda i: (0, 0)),        # resident b1
                pl.BlockSpec((dim, dim), lambda i: (0, 0)),      # resident W2
                pl.BlockSpec((1, dim), lambda i: (0, 0)),        # resident b2
            ],
            out_specs=pl.BlockSpec((bn, dim), lambda i: (i, 0)), # lane-dense (dim = 512)
        ),
        compiler_params=pltpu.CompilerParams(
            dimension_semantics=("parallel",),
        ),
    )(t2, table, w1, b1_2, w2, b2_2)
    return out[:n]


if __name__ == "__main__":
    # Spec defaults from the module docstring: T=1000, d_model=128, dim=4*d_model=512.
    T, d_model, dim = 1000, 128, 512
    n = 8  # number of timesteps in the batch

    key = jax.random.PRNGKey(0)
    k_t, k_w1, k_w2 = jax.random.split(key, 3)

    t = jax.random.randint(k_t, (n,), 0, T, dtype=jnp.int32)
    table = _build_time_table(T, d_model)

    # Xavier-uniform linear weights, zero biases (matches TimeEmbedding.initialize()).
    lim1 = math.sqrt(6.0 / (d_model + dim))
    lim2 = math.sqrt(6.0 / (dim + dim))
    w1 = jax.random.uniform(k_w1, (d_model, dim), jnp.float32, -lim1, lim1)
    b1 = jnp.zeros((dim,), jnp.float32)
    w2 = jax.random.uniform(k_w2, (dim, dim), jnp.float32, -lim2, lim2)
    b2 = jnp.zeros((dim,), jnp.float32)

    out = time_embedding_forward(t, table, w1, b1, w2, b2)
    out = jax.block_until_ready(out)

    # Plain-JAX reference of the same forward pass.
    x_ref = table[t]
    h_ref = x_ref @ w1 + b1
    h_ref = h_ref * jax.nn.sigmoid(h_ref)
    ref = h_ref @ w2 + b2

    assert out.shape == (n, dim)
    assert jnp.allclose(out, ref, atol=2e-2, rtol=2e-2), "mismatch vs reference"

    print("KERNEL_OK")
</pallas_src>

<mosaic_0001>
module attributes {stable_mosaic.version = 11 : i64} {
  func.func @_time_embedding_kernel(%arg0: i32, %arg1: memref<8x1xi32, #tpu.memory_space<vmem>>, %arg2: memref<1000x128xf32, #tpu.memory_space<vmem>>, %arg3: memref<128x512xf32, #tpu.memory_space<vmem>>, %arg4: memref<1x512xf32, #tpu.memory_space<vmem>>, %arg5: memref<512x512xf32, #tpu.memory_space<vmem>>, %arg6: memref<1x512xf32, #tpu.memory_space<vmem>>, %arg7: memref<8x512xf32, #tpu.memory_space<vmem>>) attributes {dimension_semantics = [#tpu.dimension_semantics<parallel>], iteration_bounds = array<i64: 1>, scalar_prefetch = 0 : i64, scratch_operands = 0 : i64, tpu.core_type = #tpu.core_type<tc>, window_params = [{transform_indices = @transform_0, window_bounds = array<i64: 8, 1>}, {pipeline_mode = #tpu.pipeline_mode<synchronous>, transform_indices = @transform_1, window_bounds = array<i64: 1000, 128>}, {pipeline_mode = #tpu.pipeline_mode<synchronous>, transform_indices = @transform_2, window_bounds = array<i64: 128, 512>}, {pipeline_mode = #tpu.pipeline_mode<synchronous>, transform_indices = @transform_3, window_bounds = array<i64: 1, 512>}, {pipeline_mode = #tpu.pipeline_mode<synchronous>, transform_indices = @transform_4, window_bounds = array<i64: 512, 512>}, {pipeline_mode = #tpu.pipeline_mode<synchronous>, transform_indices = @transform_5, window_bounds = array<i64: 1, 512>}, {transform_indices = @transform_6, window_bounds = array<i64: 8, 512>}]} {
    %c0 = arith.constant 0 : index
    %c0_0 = arith.constant 0 : index
    %0 = vector.load %arg1[%c0, %c0_0] : memref<8x1xi32, #tpu.memory_space<vmem>>, vector<8x1xi32>
    %1 = tpu.iota {dimensions = array<i32: 1>} : vector<8x1000xi32>
    %2 = vector.broadcast %0 : vector<8x1xi32> to vector<8x1000xi32>
    %3 = arith.cmpi eq, %1, %2 : vector<8x1000xi32>
    %4 = arith.extui %3 : vector<8x1000xi1> to vector<8x1000xi32>
    %5 = arith.sitofp %4 : vector<8x1000xi32> to vector<8x1000xf32>
    %c0_1 = arith.constant 0 : index
    %c0_2 = arith.constant 0 : index
    %6 = vector.load %arg2[%c0_1, %c0_2] : memref<1000x128xf32, #tpu.memory_space<vmem>>, vector<1000x128xf32>
    %cst = arith.constant dense<0.000000e+00> : vector<8x128xf32>
    %7 = tpu.matmul %5, %6, %cst {dimension_numbers = #tpu.dot_dimension_numbers<[1], [0], [0], [1], [0, 0, 1, 1], [], []>} : vector<8x1000xf32>, vector<1000x128xf32>, vector<8x128xf32> -> vector<8x128xf32>
    %c0_3 = arith.constant 0 : index
    %c0_4 = arith.constant 0 : index
    %8 = vector.load %arg3[%c0_3, %c0_4] : memref<128x512xf32, #tpu.memory_space<vmem>>, vector<128x512xf32>
    %cst_5 = arith.constant dense<0.000000e+00> : vector<8x512xf32>
    %9 = tpu.matmul %7, %8, %cst_5 {dimension_numbers = #tpu.dot_dimension_numbers<[1], [0], [0], [1], [0, 0, 1, 1], [], []>} : vector<8x128xf32>, vector<128x512xf32>, vector<8x512xf32> -> vector<8x512xf32>
    %c0_6 = arith.constant 0 : index
    %c0_7 = arith.constant 0 : index
    %10 = vector.load %arg4[%c0_6, %c0_7] : memref<1x512xf32, #tpu.memory_space<vmem>>, vector<1x512xf32>
    %11 = vector.broadcast %10 : vector<1x512xf32> to vector<8x512xf32>
    %12 = arith.addf %9, %11 : vector<8x512xf32>
    %13 = arith.negf %12 : vector<8x512xf32>
    %14 = math.exp %13 : vector<8x512xf32>
    %cst_8 = arith.constant 1.000000e+00 : f32
    %15 = vector.broadcast %cst_8 : f32 to vector<8x512xf32>
    %16 = arith.addf %15, %14 : vector<8x512xf32>
    %17 = arith.divf %15, %16 : vector<8x512xf32>
    %18 = arith.mulf %12, %17 : vector<8x512xf32>
    %c0_9 = arith.constant 0 : index
    %c0_10 = arith.constant 0 : index
    %19 = vector.load %arg5[%c0_9, %c0_10] : memref<512x512xf32, #tpu.memory_space<vmem>>, vector<512x512xf32>
    %cst_11 = arith.constant dense<0.000000e+00> : vector<8x512xf32>
    %20 = tpu.matmul %18, %19, %cst_11 {dimension_numbers = #tpu.dot_dimension_numbers<[1], [0], [0], [1], [0, 0, 1, 1], [], []>} : vector<8x512xf32>, vector<512x512xf32>, vector<8x512xf32> -> vector<8x512xf32>
    %c0_12 = arith.constant 0 : index
    %c0_13 = arith.constant 0 : index
    %21 = vector.load %arg6[%c0_12, %c0_13] : memref<1x512xf32, #tpu.memory_space<vmem>>, vector<1x512xf32>
    %22 = vector.broadcast %21 : vector<1x512xf32> to vector<8x512xf32>
    %23 = arith.addf %20, %22 : vector<8x512xf32>
    %c0_14 = arith.constant 0 : index
    %c0_15 = arith.constant 0 : index
    %24 = vector.load %arg7[%c0_14, %c0_15] : memref<8x512xf32, #tpu.memory_space<vmem>>, vector<8x512xf32>
    tpu.vector_store %arg7[%c0_14, %c0_15], %23 {strides = array<i32>} : memref<8x512xf32, #tpu.memory_space<vmem>>, vector<8x512xf32>,
    return
  }
  func.func @transform_0(%arg0: i32) -> (i32, i32) {
    %c0_i32 = arith.constant 0 : i32
    %c0_i32_0 = arith.constant 0 : i32
    return %arg0, %c0_i32 : i32, i32
  }
  func.func @transform_1(%arg0: i32) -> (i32, i32) {
    %c0_i32 = arith.constant 0 : i32
    %c0_i32_0 = arith.constant 0 : i32
    %c0_i32_1 = arith.constant 0 : i32
    return %c0_i32, %c0_i32_0 : i32, i32
  }
  func.func @transform_2(%arg0: i32) -> (i32, i32) {
    %c0_i32 = arith.constant 0 : i32
    %c0_i32_0 = arith.constant 0 : i32
    %c0_i32_1 = arith.constant 0 : i32
    return %c0_i32, %c0_i32_0 : i32, i32
  }
  func.func @transform_3(%arg0: i32) -> (i32, i32) {
    %c0_i32 = arith.constant 0 : i32
    %c0_i32_0 = arith.constant 0 : i32
    %c0_i32_1 = arith.constant 0 : i32
    return %c0_i32, %c0_i32_0 : i32, i32
  }
  func.func @transform_4(%arg0: i32) -> (i32, i32) {
    %c0_i32 = arith.constant 0 : i32
    %c0_i32_0 = arith.constant 0 : i32
    %c0_i32_1 = arith.constant 0 : i32
    return %c0_i32, %c0_i32_0 : i32, i32
  }
  func.func @transform_5(%arg0: i32) -> (i32, i32) {
    %c0_i32 = arith.constant 0 : i32
    %c0_i32_0 = arith.constant 0 : i32
    %c0_i32_1 = arith.constant 0 : i32
    return %c0_i32, %c0_i32_0 : i32, i32
  }
  func.func @transform_6(%arg0: i32) -> (i32, i32) {
    %c0_i32 = arith.constant 0 : i32
    %c0_i32_0 = arith.constant 0 : i32
    return %arg0, %c0_i32 : i32, i32
  }
}

</mosaic_0001>

<llo_original>
// kernel: tpu_custom_call.1
$region0: #{tpu_custom_call.1}
  #allocation0 [shape = 'u32[]', space=smem, size = 0x4, offset = 0x4, fixed_abs, tag = 'smem constant byte address 0x4 - core index']
  #allocation1 [shape = 'u32[72,128]{1,0:T(1,128)}', space=vmem, size = 0x9000, scoped, tag = 'internal scratch']
  %s0 = inlined_call_operand.vmem [shape: s32[8,1], index: 0, kind: input, shape index: {}]
  %s1 = inlined_call_operand.hbm [shape: f32[1000,128], index: 1, kind: input, shape index: {}]
  %s2 = inlined_call_operand.hbm [shape: f32[128,512], index: 2, kind: input, shape index: {}]
  %s3 = inlined_call_operand.vmem [shape: f32[1,512], index: 3, kind: input, shape index: {}]
  %s4 = inlined_call_operand.hbm [shape: f32[512,512], index: 4, kind: input, shape index: {}]
  %s5 = inlined_call_operand.vmem [shape: f32[1,512], index: 5, kind: input, shape index: {}]
  %s6 = inlined_call_operand.hbm [shape: f32[8,512], index: 6, kind: output, shape index: {}]
  %s7 = sld [smem:[#allocation0]]
  $region46: #{tpu_custom_call.1} parent=0
    _
  %s9 = ssub.s32 1, %s7
  %s10 = scalar_select 0, %s9, %s7
  $region1: #{tpu_custom_call.1} parent=0
    #allocation2 [shape = 'u8[512000]{0}', space=vmem, size = 0x7d000, scoped, tag = 'input window, operand 1, single buffered']
    #allocation3 [shape = 's32[1]{0}', space=sflag, size = 0x4, scoped, tag = 'scoped memory for tpu_custom_call.1']
    #allocation4 [shape = 's32[1]{0}', space=sflag, size = 0x4, scoped, tag = 'scoped memory for tpu_custom_call.1']
    #allocation5 [shape = 'u8[262144]{0}', space=vmem, size = 0x40000, scoped, tag = 'input window, operand 2, single buffered']
    #allocation6 [shape = 's32[1]{0}', space=sflag, size = 0x4, scoped, tag = 'scoped memory for tpu_custom_call.1']
    #allocation7 [shape = 'u8[1048576]{0}', space=vmem, size = 0x100000, scoped, tag = 'input window, operand 4, single buffered']
    #allocation8 [shape = 'u8[16384]{0}', space=vmem, size = 0x4000, scoped, tag = 'output window, operand 0, single buffered']
    %11 = vsyncpa [#allocation3], 0
    %12 = vsyncpa [#allocation6], 0
    %13 = vsyncpa [#allocation4], 0
    // Predicated region
    $region2: #{tpu_custom_call.1} parent=1 // pred_check
      _
    $region3: #{tpu_custom_call.1} parent=1 // pred_check_branch
      %15 = sbr.rel (0) target = $region5
    $region4: #{tpu_custom_call.1} parent=1 // pred_region
      _
    $region5: #{tpu_custom_call.1} parent=1 // pred_fallthru
      _
    // Predicated region
    $region6: #{tpu_custom_call.1} parent=1 // pred_check
      _
    $region7: #{tpu_custom_call.1} parent=1 // pred_check_branch
      %17 = sbr.rel (0) target = $region9
    $region8: #{tpu_custom_call.1} parent=1 // pred_region
      %19 = vsyncadd [#allocation3], 0
      %s20 = sshll.u32 %s1, 4
      %s21 = int_to_ptr.hbm [resolvable:$true] %s20
      %s22 = sshll.u32 [#allocation2], 4
      %s23 = int_to_ptr.vmem [resolvable:$true] %s22
      %28 = dma.hbm_to_vmem [thread:$0]  %s21, 16000, %s23, [#allocation3], 128, 128, 8
    $region9: #{tpu_custom_call.1} parent=1 // pred_fallthru
      _
    // Predicated region
    $region10: #{tpu_custom_call.1} parent=1 // pred_check
      _
    $region11: #{tpu_custom_call.1} parent=1 // pred_check_branch
      %30 = sbr.rel (0) target = $region13
    $region12: #{tpu_custom_call.1} parent=1 // pred_region
      %32 = vsyncadd [#allocation6], 0
      %s33 = sshll.u32 %s2, 4
      %s34 = int_to_ptr.hbm [resolvable:$true] %s33
      %s35 = sshll.u32 [#allocation5], 4
      %s36 = int_to_ptr.vmem [resolvable:$true] %s35
      %41 = dma.hbm_to_vmem [thread:$0]  %s34, 8192, %s36, [#allocation6], 512, 512, 32
    $region13: #{tpu_custom_call.1} parent=1 // pred_fallthru
      _
    // Predicated region
    $region14: #{tpu_custom_call.1} parent=1 // pred_check
      _
    $region15: #{tpu_custom_call.1} parent=1 // pred_check_branch
      %43 = sbr.rel (0) target = $region17
    $region16: #{tpu_custom_call.1} parent=1 // pred_region
      _
    $region17: #{tpu_custom_call.1} parent=1 // pred_fallthru
      _
    // Predicated region
    $region18: #{tpu_custom_call.1} parent=1 // pred_check
      _
    $region19: #{tpu_custom_call.1} parent=1 // pred_check_branch
      %45 = sbr.rel (0) target = $region21
    $region20: #{tpu_custom_call.1} parent=1 // pred_region
      %47 = vsyncadd [#allocation6], 0
      %s48 = sshll.u32 %s4, 4
      %s49 = int_to_ptr.hbm [resolvable:$true] %s48
      %s50 = sshll.u32 [#allocation7], 4
      %s51 = int_to_ptr.vmem [resolvable:$true] %s50
      %56 = dma.hbm_to_vmem [thread:$0]  %s49, 32768, %s51, [#allocation6], 512, 512, 32
    $region21: #{tpu_custom_call.1} parent=1 // pred_fallthru
      _
    // Predicated region
    $region22: #{tpu_custom_call.1} parent=1 // pred_check
      _
    $region23: #{tpu_custom_call.1} parent=1 // pred_check_branch
      %58 = sbr.rel (0) target = $region25
    $region24: #{tpu_custom_call.1} parent=1 // pred_region
      _
    $region25: #{tpu_custom_call.1} parent=1 // pred_fallthru
      _
    // Predicated region
    $region26: #{tpu_custom_call.1} parent=1 // pred_check
      _
    $region27: #{tpu_custom_call.1} parent=1 // pred_check_branch
      %60 = sbr.rel (0) target = $region29
    $region28: #{tpu_custom_call.1} parent=1 // pred_region
      %62 = dma.done [#allocation3], 16000
    $region29: #{tpu_custom_call.1} parent=1 // pred_fallthru
      _
    // Predicated region
    $region30: #{tpu_custom_call.1} parent=1 // pred_check
      _
    $region31: #{tpu_custom_call.1} parent=1 // pred_check_branch
      %64 = sbr.rel (0) target = $region33
    $region32: #{tpu_custom_call.1} parent=1 // pred_region
      %66 = dma.done [#allocation6], 8192
    $region33: #{tpu_custom_call.1} parent=1 // pred_fallthru
      _
    // Predicated region
    $region34: #{tpu_custom_call.1} parent=1 // pred_check
      _
    $region35: #{tpu_custom_call.1} parent=1 // pred_check_branch
      %68 = sbr.rel (0) target = $region37
    $region36: #{tpu_custom_call.1} parent=1 // pred_region
      %70 = dma.done [#allocation6], 32768
    $region37: #{tpu_custom_call.1} parent=1 // pred_fallthru
      _
    %v71 = vld [vmem:[%s0] sm:$0xff]
    %v72 = vlaneseq
    %v73 = vand.u32 %v72, 127
    %v74 = vadd.s32 %v73, 128
    %v75 = vadd.s32 %v73, 256
    %v76 = vadd.s32 %v73, 384
    %v77 = vadd.s32 %v73, 512
    %v78 = vadd.s32 %v73, 640
    %v79 = vadd.s32 %v73, 768
    %v80 = vadd.s32 %v73, 896
    %81 = vset.pattern.permute.xlu0 0
    %82 = vperm.xlu0 %81, %v71
    %v83 = vpop.permute.xlu0 %82
    %vm84 = vcmp.eq.s32.totalorder %v73, %v83
    %vm85 = vcmp.eq.s32.totalorder %v74, %v83
    %vm86 = vcmp.eq.s32.totalorder %v75, %v83
    %vm87 = vcmp.eq.s32.totalorder %v76, %v83
    %vm88 = vcmp.eq.s32.totalorder %v77, %v83
    %vm89 = vcmp.eq.s32.totalorder %v78, %v83
    %vm90 = vcmp.eq.s32.totalorder %v79, %v83
    %vm91 = vcmp.eq.s32.totalorder %v80, %v83
    %v92 = vsel %vm84, 1, 0
    %v93 = vsel %vm85, 1, 0
    %v94 = vsel %vm86, 1, 0
    %v95 = vsel %vm87, 1, 0
    %v96 = vsel %vm88, 1, 0
    %v97 = vsel %vm89, 1, 0
    %v98 = vsel %vm90, 1, 0
    %v99 = vsel %vm91, 1, 0
    %v100 = vcvt.s32.f32 %v92
    %v101 = vcvt.s32.f32 %v93
    %v102 = vcvt.s32.f32 %v94
    %v103 = vcvt.s32.f32 %v95
    %v104 = vcvt.s32.f32 %v96
    %v105 = vcvt.s32.f32 %v97
    %v106 = vcvt.s32.f32 %v98
    %v107 = vcvt.s32.f32 %v99
    %v108 = vld [vmem:[#allocation2] sm:$0xff]
    %v109 = vld [vmem:[#allocation2 + $0x8] sm:$0xff]
    %v110 = vld [vmem:[#allocation2 + $0x10] sm:$0xff]
    %v111 = vld [vmem:[#allocation2 + $0x18] sm:$0xff]
    %v112 = vld [vmem:[#allocation2 + $0x20] sm:$0xff]
    %v113 = vld [vmem:[#allocation2 + $0x28] sm:$0xff]
    %v114 = vld [vmem:[#allocation2 + $0x30] sm:$0xff]
    %v115 = vld [vmem:[#allocation2 + $0x38] sm:$0xff]
    %v116 = vld [vmem:[#allocation2 + $0x40] sm:$0xff]
    %v117 = vld [vmem:[#allocation2 + $0x48] sm:$0xff]
    %v118 = vld [vmem:[#allocation2 + $0x50] sm:$0xff]
    %v119 = vld [vmem:[#allocation2 + $0x58] sm:$0xff]
    %v120 = vld [vmem:[#allocation2 + $0x60] sm:$0xff]
    %v121 = vld [vmem:[#allocation2 + $0x68] sm:$0xff]
    %v122 = vld [vmem:[#allocation2 + $0x70] sm:$0xff]
    %v123 = vld [vmem:[#allocation2 + $0x78] sm:$0xff]
    %v124 = vld [vmem:[#allocation2 + $0x80] sm:$0xff]
    %v125 = vld [vmem:[#allocation2 + $0x88] sm:$0xff]
    %v126 = vld [vmem:[#allocation2 + $0x90] sm:$0xff]
    %v127 = vld [vmem:[#allocation2 + $0x98] sm:$0xff]
    %v128 = vld [vmem:[#allocation2 + $0xa0] sm:$0xff]
    %v129 = vld [vmem:[#allocation2 + $0xa8] sm:$0xff]
    %v130 = vld [vmem:[#allocation2 + $0xb0] sm:$0xff]
    %v131 = vld [vmem:[#allocation2 + $0xb8] sm:$0xff]
    %v132 = vld [vmem:[#allocation2 + $0xc0] sm:$0xff]
    %v133 = vld [vmem:[#allocation2 + $0xc8] sm:$0xff]
    %v134 = vld [vmem:[#allocation2 + $0xd0] sm:$0xff]
    %v135 = vld [vmem:[#allocation2 + $0xd8] sm:$0xff]
    %v136 = vld [vmem:[#allocation2 + $0xe0] sm:$0xff]
    %v137 = vld [vmem:[#allocation2 + $0xe8] sm:$0xff]
    %v138 = vld [vmem:[#allocation2 + $0xf0] sm:$0xff]
    %v139 = vld [vmem:[#allocation2 + $0xf8] sm:$0xff]
    %v140 = vld [vmem:[#allocation2 + $0x100] sm:$0xff]
    %v141 = vld [vmem:[#allocation2 + $0x108] sm:$0xff]
    %v142 = vld [vmem:[#allocation2 + $0x110] sm:$0xff]
    %v143 = vld [vmem:[#allocation2 + $0x118] sm:$0xff]
    %v144 = vld [vmem:[#allocation2 + $0x120] sm:$0xff]
    %v145 = vld [vmem:[#allocation2 + $0x128] sm:$0xff]
    %v146 = vld [vmem:[#allocation2 + $0x130] sm:$0xff]
    %v147 = vld [vmem:[#allocation2 + $0x138] sm:$0xff]
    %v148 = vld [vmem:[#allocation2 + $0x140] sm:$0xff]
    %v149 = vld [vmem:[#allocation2 + $0x148] sm:$0xff]
    %v150 = vld [vmem:[#allocation2 + $0x150] sm:$0xff]
    %v151 = vld [vmem:[#allocation2 + $0x158] sm:$0xff]
    %v152 = vld [vmem:[#allocation2 + $0x160] sm:$0xff]
    %v153 = vld [vmem:[#allocation2 + $0x168] sm:$0xff]
    %v154 = vld [vmem:[#allocation2 + $0x170] sm:$0xff]
    %v155 = vld [vmem:[#allocation2 + $0x178] sm:$0xff]
    %v156 = vld [vmem:[#allocation2 + $0x180] sm:$0xff]
    %v157 = vld [vmem:[#allocation2 + $0x188] sm:$0xff]
    %v158 = vld [vmem:[#allocation2 + $0x190] sm:$0xff]
    %v159 = vld [vmem:[#allocation2 + $0x198] sm:$0xff]
    %v160 = vld [vmem:[#allocation2 + $0x1a0] sm:$0xff]
    %v161 = vld [vmem:[#allocation2 + $0x1a8] sm:$0xff]
    %v162 = vld [vmem:[#allocation2 + $0x1b0] sm:$0xff]
    %v163 = vld [vmem:[#allocation2 + $0x1b8] sm:$0xff]
    %v164 = vld [vmem:[#allocation2 + $0x1c0] sm:$0xff]
    %v165 = vld [vmem:[#allocation2 + $0x1c8] sm:$0xff]
    %v166 = vld [vmem:[#allocation2 + $0x1d0] sm:$0xff]
    %v167 = vld [vmem:[#allocation2 + $0x1d8] sm:$0xff]
    %v168 = vld [vmem:[#allocation2 + $0x1e0] sm:$0xff]
    %v169 = vld [vmem:[#allocation2 + $0x1e8] sm:$0xff]
    %v170 = vld [vmem:[#allocation2 + $0x1f0] sm:$0xff]
    %v171 = vld [vmem:[#allocation2 + $0x1f8] sm:$0xff]
    %v172 = vld [vmem:[#allocation2 + $0x200] sm:$0xff]
    %v173 = vld [vmem:[#allocation2 + $0x208] sm:$0xff]
    %v174 = vld [vmem:[#allocation2 + $0x210] sm:$0xff]
    %v175 = vld [vmem:[#allocation2 + $0x218] sm:$0xff]
    %v176 = vld [vmem:[#allocation2 + $0x220] sm:$0xff]
    %v177 = vld [vmem:[#allocation2 + $0x228] sm:$0xff]
    %v178 = vld [vmem:[#allocation2 + $0x230] sm:$0xff]
    %v179 = vld [vmem:[#allocation2 + $0x238] sm:$0xff]
    %v180 = vld [vmem:[#allocation2 + $0x240] sm:$0xff]
    %v181 = vld [vmem:[#allocation2 + $0x248] sm:$0xff]
    %v182 = vld [vmem:[#allocation2 + $0x250] sm:$0xff]
    %v183 = vld [vmem:[#allocation2 + $0x258] sm:$0xff]
    %v184 = vld [vmem:[#allocation2 + $0x260] sm:$0xff]
    %v185 = vld [vmem:[#allocation2 + $0x268] sm:$0xff]
    %v186 = vld [vmem:[#allocation2 + $0x270] sm:$0xff]
    %v187 = vld [vmem:[#allocation2 + $0x278] sm:$0xff]
    %v188 = vld [vmem:[#allocation2 + $0x280] sm:$0xff]
    %v189 = vld [vmem:[#allocation2 + $0x288] sm:$0xff]
    %v190 = vld [vmem:[#allocation2 + $0x290] sm:$0xff]
    %v191 = vld [vmem:[#allocation2 + $0x298] sm:$0xff]
    %v192 = vld [vmem:[#allocation2 + $0x2a0] sm:$0xff]
    %v193 = vld [vmem:[#allocation2 + $0x2a8] sm:$0xff]
    %v194 = vld [vmem:[#allocation2 + $0x2b0] sm:$0xff]
    %v195 = vld [vmem:[#allocation2 + $0x2b8] sm:$0xff]
    %v196 = vld [vmem:[#allocation2 + $0x2c0] sm:$0xff]
    %v197 = vld [vmem:[#allocation2 + $0x2c8] sm:$0xff]
    %v198 = vld [vmem:[#allocation2 + $0x2d0] sm:$0xff]
    %v199 = vld [vmem:[#allocation2 + $0x2d8] sm:$0xff]
    %v200 = vld [vmem:[#allocation2 + $0x2e0] sm:$0xff]
    %v201 = vld [vmem:[#allocation2 + $0x2e8] sm:$0xff]
    %v202 = vld [vmem:[#allocation2 + $0x2f0] sm:$0xff]
    %v203 = vld [vmem:[#allocation2 + $0x2f8] sm:$0xff]
    %v204 = vld [vmem:[#allocation2 + $0x300] sm:$0xff]
    %v205 = vld [vmem:[#allocation2 + $0x308] sm:$0xff]
    %v206 = vld [vmem:[#allocation2 + $0x310] sm:$0xff]
    %v207 = vld [vmem:[#allocation2 + $0x318] sm:$0xff]
    %v208 = vld [vmem:[#allocation2 + $0x320] sm:$0xff]
    %v209 = vld [vmem:[#allocation2 + $0x328] sm:$0xff]
    %v210 = vld [vmem:[#allocation2 + $0x330] sm:$0xff]
    %v211 = vld [vmem:[#allocation2 + $0x338] sm:$0xff]
    %v212 = vld [vmem:[#allocation2 + $0x340] sm:$0xff]
    %v213 = vld [vmem:[#allocation2 + $0x348] sm:$0xff]
    %v214 = vld [vmem:[#allocation2 + $0x350] sm:$0xff]
    %v215 = vld [vmem:[#allocation2 + $0x358] sm:$0xff]
    %v216 = vld [vmem:[#allocation2 + $0x360] sm:$0xff]
    %v217 = vld [vmem:[#allocation2 + $0x368] sm:$0xff]
    %v218 = vld [vmem:[#allocation2 + $0x370] sm:$0xff]
    %v219 = vld [vmem:[#allocation2 + $0x378] sm:$0xff]
    %v220 = vld [vmem:[#allocation2 + $0x380] sm:$0xff]
    %v221 = vld [vmem:[#allocation2 + $0x388] sm:$0xff]
    %v222 = vld [vmem:[#allocation2 + $0x390] sm:$0xff]
    %v223 = vld [vmem:[#allocation2 + $0x398] sm:$0xff]
    %v224 = vld [vmem:[#allocation2 + $0x3a0] sm:$0xff]
    %v225 = vld [vmem:[#allocation2 + $0x3a8] sm:$0xff]
    %v226 = vld [vmem:[#allocation2 + $0x3b0] sm:$0xff]
    %v227 = vld [vmem:[#allocation2 + $0x3b8] sm:$0xff]
    %v228 = vld [vmem:[#allocation2 + $0x3c0] sm:$0xff]
    %v229 = vld [vmem:[#allocation2 + $0x3c8] sm:$0xff]
    %v230 = vld [vmem:[#allocation2 + $0x3d0] sm:$0xff]
    %v231 = vld [vmem:[#allocation2 + $0x3d8] sm:$0xff]
    %v232 = vld [vmem:[#allocation2 + $0x3e0] sm:$0xff]
    %vm233 = vcmask 850944
    %v235 = vsel %vm233, %v107, 0
    %237 = vmatpush.msra.mxu0 %v123
    %238 = vmatpush.msra.mxu0 %v122
    %239 = vmatpush.msra.mxu0 %v121
    %240 = vmatpush.msra.mxu0 %v120
    %241 = vmatpush.msra.mxu0 %v119
    %242 = vmatpush.msra.mxu0 %v118
    %243 = vmatpush.msra.mxu0 %v117
    %244 = vmatpush.msra.mxu0 %v116
    %245 = vmatpush.msra.mxu0 %v115
    %246 = vmatpush.msra.mxu0 %v114
    %247 = vmatpush.msra.mxu0 %v113
    %248 = vmatpush.msra.mxu0 %v112
    %249 = vmatpush.msra.mxu0 %v111
    %250 = vmatpush.msra.mxu0 %v110
    %251 = vmatpush.msra.mxu0 %v109
    %252 = vmatpush.msra.mxu0 %v108
    %253 = vmatmul.f32.gmra.mxu0 %v100
    %v254 = vpop.f32.mrf.mxu0
    %v255 = vadd.f32 0.0, %v254
    %256 = vdwg.mxu0
    %257 = vmatpush.msra.mxu0 %v139
    %258 = vmatpush.msra.mxu0 %v138
    %259 = vmatpush.msra.mxu0 %v137
    %260 = vmatpush.msra.mxu0 %v136
    %261 = vmatpush.msra.mxu0 %v135
    %262 = vmatpush.msra.mxu0 %v134
    %263 = vmatpush.msra.mxu0 %v133
    %264 = vmatpush.msra.mxu0 %v132
    %265 = vmatpush.msra.mxu0 %v131
    %266 = vmatpush.msra.mxu0 %v130
    %267 = vmatpush.msra.mxu0 %v129
    %268 = vmatpush.msra.mxu0 %v128
    %269 = vmatpush.msra.mxu0 %v127
    %270 = vmatpush.msra.mxu0 %v126
    %271 = vmatpush.msra.mxu0 %v125
    %272 = vmatpush.msra.mxu0 %v124
    %273 = vmatmul.f32.gmra.mxu0 %v101
    %v274 = vpop.f32.mrf.mxu0
    %v275 = vadd.f32 %v255, %v274
    %276 = vdwg.mxu0
    %277 = vmatpush.msra.mxu0 %v155
    %278 = vmatpush.msra.mxu0 %v154
    %279 = vmatpush.msra.mxu0 %v153
    %280 = vmatpush.msra.mxu0 %v152
    %281 = vmatpush.msra.mxu0 %v151
    %282 = vmatpush.msra.mxu0 %v150
    %283 = vmatpush.msra.mxu0 %v149
    %284 = vmatpush.msra.mxu0 %v148
    %285 = vmatpush.msra.mxu0 %v147
    %286 = vmatpush.msra.mxu0 %v146
    %287 = vmatpush.msra.mxu0 %v145
    %288 = vmatpush.msra.mxu0 %v144
    %289 = vmatpush.msra.mxu0 %v143
    %290 = vmatpush.msra.mxu0 %v142
    %291 = vmatpush.msra.mxu0 %v141
    %292 = vmatpush.msra.mxu0 %v140
    %293 = vmatmul.f32.gmra.mxu0 %v102
    %v294 = vpop.f32.mrf.mxu0
    %v295 = vadd.f32 %v275, %v294
    %296 = vdwg.mxu0
    %297 = vmatpush.msra.mxu0 %v171
    %298 = vmatpush.msra.mxu0 %v170
    %299 = vmatpush.msra.mxu0 %v169
    %300 = vmatpush.msra.mxu0 %v168
    %301 = vmatpush.msra.mxu0 %v167
    %302 = vmatpush.msra.mxu0 %v166
    %303 = vmatpush.msra.mxu0 %v165
    %304 = vmatpush.msra.mxu0 %v164
    %305 = vmatpush.msra.mxu0 %v163
    %306 = vmatpush.msra.mxu0 %v162
    %307 = vmatpush.msra.mxu0 %v161
    %308 = vmatpush.msra.mxu0 %v160
    %309 = vmatpush.msra.mxu0 %v159
    %310 = vmatpush.msra.mxu0 %v158
    %311 = vmatpush.msra.mxu0 %v157
    %312 = vmatpush.msra.mxu0 %v156
    %313 = vmatmul.f32.gmra.mxu0 %v103
    %v314 = vpop.f32.mrf.mxu0
    %v315 = vadd.f32 %v295, %v314
    %316 = vdwg.mxu0
    %317 = vmatpush.msra.mxu0 %v187
    %318 = vmatpush.msra.mxu0 %v186
    %319 = vmatpush.msra.mxu0 %v185
    %320 = vmatpush.msra.mxu0 %v184
    %321 = vmatpush.msra.mxu0 %v183
    %322 = vmatpush.msra.mxu0 %v182
    %323 = vmatpush.msra.mxu0 %v181
    %324 = vmatpush.msra.mxu0 %v180
    %325 = vmatpush.msra.mxu0 %v179
    %326 = vmatpush.msra.mxu0 %v178
    %327 = vmatpush.msra.mxu0 %v177
    %328 = vmatpush.msra.mxu0 %v176
    %329 = vmatpush.msra.mxu0 %v175
    %330 = vmatpush.msra.mxu0 %v174
    %331 = vmatpush.msra.mxu0 %v173
    %332 = vmatpush.msra.mxu0 %v172
    %333 = vmatmul.f32.gmra.mxu0 %v104
    %v334 = vpop.f32.mrf.mxu0
    %v335 = vadd.f32 %v315, %v334
    %336 = vdwg.mxu0
    %337 = vmatpush.msra.mxu0 %v203
    %338 = vmatpush.msra.mxu0 %v202
    %339 = vmatpush.msra.mxu0 %v201
    %340 = vmatpush.msra.mxu0 %v200
    %341 = vmatpush.msra.mxu0 %v199
    %342 = vmatpush.msra.mxu0 %v198
    %343 = vmatpush.msra.mxu0 %v197
    %344 = vmatpush.msra.mxu0 %v196
    %345 = vmatpush.msra.mxu0 %v195
    %346 = vmatpush.msra.mxu0 %v194
    %347 = vmatpush.msra.mxu0 %v193
    %348 = vmatpush.msra.mxu0 %v192
    %349 = vmatpush.msra.mxu0 %v191
    %350 = vmatpush.msra.mxu0 %v190
    %351 = vmatpush.msra.mxu0 %v189
    %352 = vmatpush.msra.mxu0 %v188
    %353 = vmatmul.f32.gmra.mxu0 %v105
    %v354 = vpop.f32.mrf.mxu0
    %v355 = vadd.f32 %v335, %v354
    %356 = vdwg.mxu0
    %357 = vmatpush.msra.mxu0 %v219
    %358 = vmatpush.msra.mxu0 %v218
    %359 = vmatpush.msra.mxu0 %v217
    %360 = vmatpush.msra.mxu0 %v216
    %361 = vmatpush.msra.mxu0 %v215
    %362 = vmatpush.msra.mxu0 %v214
    %363 = vmatpush.msra.mxu0 %v213
    %364 = vmatpush.msra.mxu0 %v212
    %365 = vmatpush.msra.mxu0 %v211
    %366 = vmatpush.msra.mxu0 %v210
    %367 = vmatpush.msra.mxu0 %v209
    %368 = vmatpush.msra.mxu0 %v208
    %369 = vmatpush.msra.mxu0 %v207
    %370 = vmatpush.msra.mxu0 %v206
    %371 = vmatpush.msra.mxu0 %v205
    %372 = vmatpush.msra.mxu0 %v204
    %373 = vmatmul.f32.gmra.mxu0 %v106
    %v374 = vpop.f32.mrf.mxu0
    %v375 = vadd.f32 %v355, %v374
    %376 = vdwg.mxu0
    %377 = vmatpush.msra.mxu0 0.0
    %378 = vmatpush.msra.mxu0 0.0
    %379 = vmatpush.msra.mxu0 0.0
    %380 = vmatpush.msra.mxu0 %v232
    %381 = vmatpush.msra.mxu0 %v231
    %382 = vmatpush.msra.mxu0 %v230
    %383 = vmatpush.msra.mxu0 %v229
    %384 = vmatpush.msra.mxu0 %v228
    %385 = vmatpush.msra.mxu0 %v227
    %386 = vmatpush.msra.mxu0 %v226
    %387 = vmatpush.msra.mxu0 %v225
    %388 = vmatpush.msra.mxu0 %v224
    %389 = vmatpush.msra.mxu0 %v223
    %390 = vmatpush.msra.mxu0 %v222
    %391 = vmatpush.msra.mxu0 %v221
    %392 = vmatpush.msra.mxu0 %v220
    %393 = vmatmul.f32.gmra.mxu0 %v235
    %v394 = vpop.f32.mrf.mxu0
    %v395 = vadd.f32 %v375, %v394
    %396 = vdwg.mxu0
    %v397 = vld [vmem:[#allocation5] sm:$0xff]
    %v398 = vld [vmem:[#allocation5 + $0x8] sm:$0xff]
    %v399 = vld [vmem:[#allocation5 + $0x10] sm:$0xff]
    %v400 = vld [vmem:[#allocation5 + $0x18] sm:$0xff]
    %v401 = vld [vmem:[#allocation5 + $0x20] sm:$0xff]
    %v402 = vld [vmem:[#allocation5 + $0x28] sm:$0xff]
    %v403 = vld [vmem:[#allocation5 + $0x30] sm:$0xff]
    %v404 = vld [vmem:[#allocation5 + $0x38] sm:$0xff]
    %v405 = vld [vmem:[#allocation5 + $0x40] sm:$0xff]
    %v406 = vld [vmem:[#allocation5 + $0x48] sm:$0xff]
    %v407 = vld [vmem:[#allocation5 + $0x50] sm:$0xff]
    %v408 = vld [vmem:[#allocation5 + $0x58] sm:$0xff]
    %v409 = vld [vmem:[#allocation5 + $0x60] sm:$0xff]
    %v410 = vld [vmem:[#allocation5 + $0x68] sm:$0xff]
    %v411 = vld [vmem:[#allocation5 + $0x70] sm:$0xff]
    %v412 = vld [vmem:[#allocation5 + $0x78] sm:$0xff]
    %v413 = vld [vmem:[#allocation5 + $0x80] sm:$0xff]
    %v414 = vld [vmem:[#allocation5 + $0x88] sm:$0xff]
    %v415 = vld [vmem:[#allocation5 + $0x90] sm:$0xff]
    %v416 = vld [vmem:[#allocation5 + $0x98] sm:$0xff]
    %v417 = vld [vmem:[#allocation5 + $0xa0] sm:$0xff]
    %v418 = vld [vmem:[#allocation5 + $0xa8] sm:$0xff]
    %v419 = vld [vmem:[#allocation5 + $0xb0] sm:$0xff]
    %v420 = vld [vmem:[#allocation5 + $0xb8] sm:$0xff]
    %v421 = vld [vmem:[#allocation5 + $0xc0] sm:$0xff]
    %v422 = vld [vmem:[#allocation5 + $0xc8] sm:$0xff]
    %v423 = vld [vmem:[#allocation5 + $0xd0] sm:$0xff]
    %v424 = vld [vmem:[#allocation5 + $0xd8] sm:$0xff]
    %v425 = vld [vmem:[#allocation5 + $0xe0] sm:$0xff]
    %v426 = vld [vmem:[#allocation5 + $0xe8] sm:$0xff]
    %v427 = vld [vmem:[#allocation5 + $0xf0] sm:$0xff]
    %v428 = vld [vmem:[#allocation5 + $0xf8] sm:$0xff]
    %v429 = vld [vmem:[#allocation5 + $0x100] sm:$0xff]
    %v430 = vld [vmem:[#allocation5 + $0x108] sm:$0xff]
    %v431 = vld [vmem:[#allocation5 + $0x110] sm:$0xff]
    %v432 = vld [vmem:[#allocation5 + $0x118] sm:$0xff]
    %v433 = vld [vmem:[#allocation5 + $0x120] sm:$0xff]
    %v434 = vld [vmem:[#allocation5 + $0x128] sm:$0xff]
    %v435 = vld [vmem:[#allocation5 + $0x130] sm:$0xff]
    %v436 = vld [vmem:[#allocation5 + $0x138] sm:$0xff]
    %v437 = vld [vmem:[#allocation5 + $0x140] sm:$0xff]
    %v438 = vld [vmem:[#allocation5 + $0x148] sm:$0xff]
    %v439 = vld [vmem:[#allocation5 + $0x150] sm:$0xff]
    %v440 = vld [vmem:[#allocation5 + $0x158] sm:$0xff]
    %v441 = vld [vmem:[#allocation5 + $0x160] sm:$0xff]
    %v442 = vld [vmem:[#allocation5 + $0x168] sm:$0xff]
    %v443 = vld [vmem:[#allocation5 + $0x170] sm:$0xff]
    %v444 = vld [vmem:[#allocation5 + $0x178] sm:$0xff]
    %v445 = vld [vmem:[#allocation5 + $0x180] sm:$0xff]
    %v446 = vld [vmem:[#allocation5 + $0x188] sm:$0xff]
    %v447 = vld [vmem:[#allocation5 + $0x190] sm:$0xff]
    %v448 = vld [vmem:[#allocation5 + $0x198] sm:$0xff]
    %v449 = vld [vmem:[#allocation5 + $0x1a0] sm:$0xff]
    %v450 = vld [vmem:[#allocation5 + $0x1a8] sm:$0xff]
    %v451 = vld [vmem:[#allocation5 + $0x1b0] sm:$0xff]
    %v452 = vld [vmem:[#allocation5 + $0x1b8] sm:$0xff]
    %v453 = vld [vmem:[#allocation5 + $0x1c0] sm:$0xff]
    %v454 = vld [vmem:[#allocation5 + $0x1c8] sm:$0xff]
    %v455 = vld [vmem:[#allocation5 + $0x1d0] sm:$0xff]
    %v456 = vld [vmem:[#allocation5 + $0x1d8] sm:$0xff]
    %v457 = vld [vmem:[#allocation5 + $0x1e0] sm:$0xff]
    %v458 = vld [vmem:[#allocation5 + $0x1e8] sm:$0xff]
    %v459 = vld [vmem:[#allocation5 + $0x1f0] sm:$0xff]
    %v460 = vld [vmem:[#allocation5 + $0x1f8] sm:$0xff]
    %v461 = vld [vmem:[%s3] sm:$0xf]
    %v463 = vperm.slane %v461, 0
    %v464 = vperm.slane %v461, 1
    %v465 = vperm.slane %v461, 2
    %v466 = vperm.slane %v461, 3
    %471 = vmatpush.msra.mxu0 %v457
    %472 = vmatpush.msra.mxu0 %v453
    %473 = vmatpush.msra.mxu0 %v449
    %474 = vmatpush.msra.mxu0 %v445
    %475 = vmatpush.msra.mxu0 %v441
    %476 = vmatpush.msra.mxu0 %v437
    %477 = vmatpush.msra.mxu0 %v433
    %478 = vmatpush.msra.mxu0 %v429
    %479 = vmatpush.msra.mxu0 %v425
    %480 = vmatpush.msra.mxu0 %v421
    %481 = vmatpush.msra.mxu0 %v417
    %482 = vmatpush.msra.mxu0 %v413
    %483 = vmatpush.msra.mxu0 %v409
    %484 = vmatpush.msra.mxu0 %v405
    %485 = vmatpush.msra.mxu0 %v401
    %486 = vmatpush.msra.mxu0 %v397
    %487 = vmatmul.f32.gmra.mxu0 %v395
    %v488 = vpop.f32.mrf.mxu0
    %v489 = vadd.f32 %v463, %v488
    %490 = vdwg.mxu0
    %491 = vmatpush.msra.mxu0 %v458
    %492 = vmatpush.msra.mxu0 %v454
    %493 = vmatpush.msra.mxu0 %v450
    %494 = vmatpush.msra.mxu0 %v446
    %495 = vmatpush.msra.mxu0 %v442
    %496 = vmatpush.msra.mxu0 %v438
    %497 = vmatpush.msra.mxu0 %v434
    %498 = vmatpush.msra.mxu0 %v430
    %499 = vmatpush.msra.mxu0 %v426
    %500 = vmatpush.msra.mxu0 %v422
    %501 = vmatpush.msra.mxu0 %v418
    %502 = vmatpush.msra.mxu0 %v414
    %503 = vmatpush.msra.mxu0 %v410
    %504 = vmatpush.msra.mxu0 %v406
    %505 = vmatpush.msra.mxu0 %v402
    %506 = vmatpush.msra.mxu0 %v398
    %507 = vmatmul.f32.gmra.mxu0 %v395
    %v508 = vpop.f32.mrf.mxu0
    %v509 = vadd.f32 %v464, %v508
    %510 = vdwg.mxu0
    %511 = vmatpush.msra.mxu0 %v459
    %512 = vmatpush.msra.mxu0 %v455
    %513 = vmatpush.msra.mxu0 %v451
    %514 = vmatpush.msra.mxu0 %v447
    %515 = vmatpush.msra.mxu0 %v443
    %516 = vmatpush.msra.mxu0 %v439
    %517 = vmatpush.msra.mxu0 %v435
    %518 = vmatpush.msra.mxu0 %v431
    %519 = vmatpush.msra.mxu0 %v427
    %520 = vmatpush.msra.mxu0 %v423
    %521 = vmatpush.msra.mxu0 %v419
    %522 = vmatpush.msra.mxu0 %v415
    %523 = vmatpush.msra.mxu0 %v411
    %524 = vmatpush.msra.mxu0 %v407
    %525 = vmatpush.msra.mxu0 %v403
    %526 = vmatpush.msra.mxu0 %v399
    %527 = vmatmul.f32.gmra.mxu0 %v395
    %v528 = vpop.f32.mrf.mxu0
    %v529 = vadd.f32 %v465, %v528
    %530 = vdwg.mxu0
    %531 = vmatpush.msra.mxu0 %v460
    %532 = vmatpush.msra.mxu0 %v456
    %533 = vmatpush.msra.mxu0 %v452
    %534 = vmatpush.msra.mxu0 %v448
    %535 = vmatpush.msra.mxu0 %v444
    %536 = vmatpush.msra.mxu0 %v440
    %537 = vmatpush.msra.mxu0 %v436
    %538 = vmatpush.msra.mxu0 %v432
    %539 = vmatpush.msra.mxu0 %v428
    %540 = vmatpush.msra.mxu0 %v424
    %541 = vmatpush.msra.mxu0 %v420
    %542 = vmatpush.msra.mxu0 %v416
    %543 = vmatpush.msra.mxu0 %v412
    %544 = vmatpush.msra.mxu0 %v408
    %545 = vmatpush.msra.mxu0 %v404
    %546 = vmatpush.msra.mxu0 %v400
    %547 = vmatmul.f32.gmra.mxu0 %v395
    %v548 = vpop.f32.mrf.mxu0
    %v549 = vadd.f32 %v466, %v548
    %550 = vdwg.mxu0
    %v551 = vxor.u32 %v489, 2147483648
    %v552 = vxor.u32 %v509, 2147483648
    %v553 = vxor.u32 %v529, 2147483648
    %v554 = vxor.u32 %v549, 2147483648
    %v555 = vmul.f32 %v551, 1.442695
    %v556 = vpow.pop %v555
    %v557 = vmul.f32 %v552, 1.442695
    %v558 = vpow.pop %v557
    %v559 = vmul.f32 %v553, 1.442695
    %v560 = vpow.pop %v559
    %v561 = vmul.f32 %v554, 1.442695
    %v562 = vpow.pop %v561
    %v563 = vadd.f32 %v556, 1.0
    %v564 = vadd.f32 %v558, 1.0
    %v565 = vadd.f32 %v560, 1.0
    %v566 = vadd.f32 %v562, 1.0
    %v567 = vrcp.pop %v563
    %v568 = vmul.f32 %v563, %v567
    %v569 = vsub.f32 1.0, %v568
    %v570 = vmul.f32 %v567, %v569
    %v571 = vadd.f32 %v567, %v570
    %vm572 = vweird.f32 %v563
    %vm573 = vweird.f32 %v567
    %vm574 = vmor %vm572, %vm573
    %v575 = vsel %vm574, %v567, %v571
    %v576 = vand.u32 2147483647, %v563
    %vm577 = vcmp.eq.f32.partialorder %v576, 8.507059e+37
    %v578 = vand.u32 %v563, 2147483648
    %v579 = vor.u32 1.1754944e-38, %v578
    %v580 = vsel %vm577, %v579, %v575
    %v581 = vmul.f32 1.0, %v580
    %v582 = vrcp.pop %v564
    %v583 = vmul.f32 %v564, %v582
    %v584 = vsub.f32 1.0, %v583
    %v585 = vmul.f32 %v582, %v584
    %v586 = vadd.f32 %v582, %v585
    %vm587 = vweird.f32 %v564
    %vm588 = vweird.f32 %v582
    %vm589 = vmor %vm587, %vm588
    %v590 = vsel %vm589, %v582, %v586
    %v591 = vand.u32 2147483647, %v564
    %vm592 = vcmp.eq.f32.partialorder %v591, 8.507059e+37
    %v593 = vand.u32 %v564, 2147483648
    %v594 = vor.u32 1.1754944e-38, %v593
    %v595 = vsel %vm592, %v594, %v590
    %v596 = vmul.f32 1.0, %v595
    %v597 = vrcp.pop %v565
    %v598 = vmul.f32 %v565, %v597
    %v599 = vsub.f32 1.0, %v598
    %v600 = vmul.f32 %v597, %v599
    %v601 = vadd.f32 %v597, %v600
    %vm602 = vweird.f32 %v565
    %vm603 = vweird.f32 %v597
    %vm604 = vmor %vm602, %vm603
    %v605 = vsel %vm604, %v597, %v601
    %v606 = vand.u32 2147483647, %v565
    %vm607 = vcmp.eq.f32.partialorder %v606, 8.507059e+37
    %v608 = vand.u32 %v565, 2147483648
    %v609 = vor.u32 1.1754944e-38, %v608
    %v610 = vsel %vm607, %v609, %v605
    %v611 = vmul.f32 1.0, %v610
    %v612 = vrcp.pop %v566
    %v613 = vmul.f32 %v566, %v612
    %v614 = vsub.f32 1.0, %v613
    %v615 = vmul.f32 %v612, %v614
    %v616 = vadd.f32 %v612, %v615
    %vm617 = vweird.f32 %v566
    %vm618 = vweird.f32 %v612
    %vm619 = vmor %vm617, %vm618
    %v620 = vsel %vm619, %v612, %v616
    %v621 = vand.u32 2147483647, %v566
    %vm622 = vcmp.eq.f32.partialorder %v621, 8.507059e+37
    %v623 = vand.u32 %v566, 2147483648
    %v624 = vor.u32 1.1754944e-38, %v623
    %v625 = vsel %vm622, %v624, %v620
    %v626 = vmul.f32 1.0, %v625
    %v627 = vmul.f32 %v489, %v581
    %v628 = vmul.f32 %v509, %v596
    %v629 = vmul.f32 %v529, %v611
    %v630 = vmul.f32 %v549, %v626
    %v631 = vld [vmem:[#allocation7] sm:$0xff]
    %v632 = vld [vmem:[#allocation7 + $0x8] sm:$0xff]
    %v633 = vld [vmem:[#allocation7 + $0x10] sm:$0xff]
    %v634 = vld [vmem:[#allocation7 + $0x18] sm:$0xff]
    %v635 = vld [vmem:[#allocation7 + $0x20] sm:$0xff]
    %v636 = vld [vmem:[#allocation7 + $0x28] sm:$0xff]
    %v637 = vld [vmem:[#allocation7 + $0x30] sm:$0xff]
    %v638 = vld [vmem:[#allocation7 + $0x38] sm:$0xff]
    %v639 = vld [vmem:[#allocation7 + $0x40] sm:$0xff]
    %v640 = vld [vmem:[#allocation7 + $0x48] sm:$0xff]
    %v641 = vld [vmem:[#allocation7 + $0x50] sm:$0xff]
    %v642 = vld [vmem:[#allocation7 + $0x58] sm:$0xff]
    %v643 = vld [vmem:[#allocation7 + $0x60] sm:$0xff]
    %v644 = vld [vmem:[#allocation7 + $0x68] sm:$0xff]
    %v645 = vld [vmem:[#allocation7 + $0x70] sm:$0xff]
    %v646 = vld [vmem:[#allocation7 + $0x78] sm:$0xff]
    %v647 = vld [vmem:[#allocation7 + $0x80] sm:$0xff]
    %v648 = vld [vmem:[#allocation7 + $0x88] sm:$0xff]
    %v649 = vld [vmem:[#allocation7 + $0x90] sm:$0xff]
    %v650 = vld [vmem:[#allocation7 + $0x98] sm:$0xff]
    %v651 = vld [vmem:[#allocation7 + $0xa0] sm:$0xff]
    %v652 = vld [vmem:[#allocation7 + $0xa8] sm:$0xff]
    %v653 = vld [vmem:[#allocation7 + $0xb0] sm:$0xff]
    %v654 = vld [vmem:[#allocation7 + $0xb8] sm:$0xff]
    %v655 = vld [vmem:[#allocation7 + $0xc0] sm:$0xff]
    %v656 = vld [vmem:[#allocation7 + $0xc8] sm:$0xff]
    %v657 = vld [vmem:[#allocation7 + $0xd0] sm:$0xff]
    %v658 = vld [vmem:[#allocation7 + $0xd8] sm:$0xff]
    %v659 = vld [vmem:[#allocation7 + $0xe0] sm:$0xff]
    %v660 = vld [vmem:[#allocation7 + $0xe8] sm:$0xff]
    %v661 = vld [vmem:[#allocation7 + $0xf0] sm:$0xff]
    %v662 = vld [vmem:[#allocation7 + $0xf8] sm:$0xff]
    %v663 = vld [vmem:[#allocation7 + $0x100] sm:$0xff]
    %v664 = vld [vmem:[#allocation7 + $0x108] sm:$0xff]
    %v665 = vld [vmem:[#allocation7 + $0x110] sm:$0xff]
    %v666 = vld [vmem:[#allocation7 + $0x118] sm:$0xff]
    %v667 = vld [vmem:[#allocation7 + $0x120] sm:$0xff]
    %v668 = vld [vmem:[#allocation7 + $0x128] sm:$0xff]
    %v669 = vld [vmem:[#allocation7 + $0x130] sm:$0xff]
    %v670 = vld [vmem:[#allocation7 + $0x138] sm:$0xff]
    %v671 = vld [vmem:[#allocation7 + $0x140] sm:$0xff]
    %v672 = vld [vmem:[#allocation7 + $0x148] sm:$0xff]
    %v673 = vld [vmem:[#allocation7 + $0x150] sm:$0xff]
    %v674 = vld [vmem:[#allocation7 + $0x158] sm:$0xff]
    %v675 = vld [vmem:[#allocation7 + $0x160] sm:$0xff]
    %v676 = vld [vmem:[#allocation7 + $0x168] sm:$0xff]
    %v677 = vld [vmem:[#allocation7 + $0x170] sm:$0xff]
    %v678 = vld [vmem:[#allocation7 + $0x178] sm:$0xff]
    %v679 = vld [vmem:[#allocation7 + $0x180] sm:$0xff]
    %v680 = vld [vmem:[#allocation7 + $0x188] sm:$0xff]
    %v681 = vld [vmem:[#allocation7 + $0x190] sm:$0xff]
    %v682 = vld [vmem:[#allocation7 + $0x198] sm:$0xff]
    %v683 = vld [vmem:[#allocation7 + $0x1a0] sm:$0xff]
    %v684 = vld [vmem:[#allocation7 + $0x1a8] sm:$0xff]
    %v685 = vld [vmem:[#allocation7 + $0x1b0] sm:$0xff]
    %v686 = vld [vmem:[#allocation7 + $0x1b8] sm:$0xff]
    %v687 = vld [vmem:[#allocation7 + $0x1c0] sm:$0xff]
    %v688 = vld [vmem:[#allocation7 + $0x1c8] sm:$0xff]
    %v689 = vld [vmem:[#allocation7 + $0x1d0] sm:$0xff]
    %v690 = vld [vmem:[#allocation7 + $0x1d8] sm:$0xff]
    %v691 = vld [vmem:[#allocation7 + $0x1e0] sm:$0xff]
    %v692 = vld [vmem:[#allocation7 + $0x1e8] sm:$0xff]
    %v693 = vld [vmem:[#allocation7 + $0x1f0] sm:$0xff]
    %v694 = vld [vmem:[#allocation7 + $0x1f8] sm:$0xff]
    %v695 = vld [vmem:[#allocation7 + $0x200] sm:$0xff]
    %v696 = vld [vmem:[#allocation7 + $0x208] sm:$0xff]
    %v697 = vld [vmem:[#allocation7 + $0x210] sm:$0xff]
    %v698 = vld [vmem:[#allocation7 + $0x218] sm:$0xff]
    %v699 = vld [vmem:[#allocation7 + $0x220] sm:$0xff]
    %v700 = vld [vmem:[#allocation7 + $0x228] sm:$0xff]
    %v701 = vld [vmem:[#allocation7 + $0x230] sm:$0xff]
    %v702 = vld [vmem:[#allocation7 + $0x238] sm:$0xff]
    %v703 = vld [vmem:[#allocation7 + $0x240] sm:$0xff]
    %v704 = vld [vmem:[#allocation7 + $0x248] sm:$0xff]
    %v705 = vld [vmem:[#allocation7 + $0x250] sm:$0xff]
    %v706 = vld [vmem:[#allocation7 + $0x258] sm:$0xff]
    %v707 = vld [vmem:[#allocation7 + $0x260] sm:$0xff]
    %v708 = vld [vmem:[#allocation7 + $0x268] sm:$0xff]
    %v709 = vld [vmem:[#allocation7 + $0x270] sm:$0xff]
    %v710 = vld [vmem:[#allocation7 + $0x278] sm:$0xff]
    %v711 = vld [vmem:[#allocation7 + $0x280] sm:$0xff]
    %v712 = vld [vmem:[#allocation7 + $0x288] sm:$0xff]
    %v713 = vld [vmem:[#allocation7 + $0x290] sm:$0xff]
    %v714 = vld [vmem:[#allocation7 + $0x298] sm:$0xff]
    %v715 = vld [vmem:[#allocation7 + $0x2a0] sm:$0xff]
    %v716 = vld [vmem:[#allocation7 + $0x2a8] sm:$0xff]
    %v717 = vld [vmem:[#allocation7 + $0x2b0] sm:$0xff]
    %v718 = vld [vmem:[#allocation7 + $0x2b8] sm:$0xff]
    %v719 = vld [vmem:[#allocation7 + $0x2c0] sm:$0xff]
    %v720 = vld [vmem:[#allocation7 + $0x2c8] sm:$0xff]
    %v721 = vld [vmem:[#allocation7 + $0x2d0] sm:$0xff]
    %v722 = vld [vmem:[#allocation7 + $0x2d8] sm:$0xff]
    %v723 = vld [vmem:[#allocation7 + $0x2e0] sm:$0xff]
    %v724 = vld [vmem:[#allocation7 + $0x2e8] sm:$0xff]
    %v725 = vld [vmem:[#allocation7 + $0x2f0] sm:$0xff]
    %v726 = vld [vmem:[#allocation7 + $0x2f8] sm:$0xff]
    %v727 = vld [vmem:[#allocation7 + $0x300] sm:$0xff]
    %v728 = vld [vmem:[#allocation7 + $0x308] sm:$0xff]
    %v729 = vld [vmem:[#allocation7 + $0x310] sm:$0xff]
    %v730 = vld [vmem:[#allocation7 + $0x318] sm:$0xff]
    %v731 = vld [vmem:[#allocation7 + $0x320] sm:$0xff]
    %v732 = vld [vmem:[#allocation7 + $0x328] sm:$0xff]
    %v733 = vld [vmem:[#allocation7 + $0x330] sm:$0xff]
    %v734 = vld [vmem:[#allocation7 + $0x338] sm:$0xff]
    %v735 = vld [vmem:[#allocation7 + $0x340] sm:$0xff]
    %v736 = vld [vmem:[#allocation7 + $0x348] sm:$0xff]
    %v737 = vld [vmem:[#allocation7 + $0x350] sm:$0xff]
    %v738 = vld [vmem:[#allocation7 + $0x358] sm:$0xff]
    %v739 = vld [vmem:[#allocation7 + $0x360] sm:$0xff]
    %v740 = vld [vmem:[#allocation7 + $0x368] sm:$0xff]
    %v741 = vld [vmem:[#allocation7 + $0x370] sm:$0xff]
    %v742 = vld [vmem:[#allocation7 + $0x378] sm:$0xff]
    %v743 = vld [vmem:[#allocation7 + $0x380] sm:$0xff]
    %v744 = vld [vmem:[#allocation7 + $0x388] sm:$0xff]
    %v745 = vld [vmem:[#allocation7 + $0x390] sm:$0xff]
    %v746 = vld [vmem:[#allocation7 + $0x398] sm:$0xff]
    %v747 = vld [vmem:[#allocation7 + $0x3a0] sm:$0xff]
    %v748 = vld [vmem:[#allocation7 + $0x3a8] sm:$0xff]
    %v749 = vld [vmem:[#allocation7 + $0x3b0] sm:$0xff]
    %v750 = vld [vmem:[#allocation7 + $0x3b8] sm:$0xff]
    %v751 = vld [vmem:[#allocation7 + $0x3c0] sm:$0xff]
    %v752 = vld [vmem:[#allocation7 + $0x3c8] sm:$0xff]
    %v753 = vld [vmem:[#allocation7 + $0x3d0] sm:$0xff]
    %v754 = vld [vmem:[#allocation7 + $0x3d8] sm:$0xff]
    %v755 = vld [vmem:[#allocation7 + $0x3e0] sm:$0xff]
    %v756 = vld [vmem:[#allocation7 + $0x3e8] sm:$0xff]
    %v757 = vld [vmem:[#allocation7 + $0x3f0] sm:$0xff]
    %v758 = vld [vmem:[#allocation7 + $0x3f8] sm:$0xff]
    %v759 = vld [vmem:[#allocation7 + $0x400] sm:$0xff]
    %v760 = vld [vmem:[#allocation7 + $0x408] sm:$0xff]
    %v761 = vld [vmem:[#allocation7 + $0x410] sm:$0xff]
    %v762 = vld [vmem:[#allocation7 + $0x418] sm:$0xff]
    %v763 = vld [vmem:[#allocation7 + $0x420] sm:$0xff]
    %v764 = vld [vmem:[#allocation7 + $0x428] sm:$0xff]
    %v765 = vld [vmem:[#allocation7 + $0x430] sm:$0xff]
    %v766 = vld [vmem:[#allocation7 + $0x438] sm:$0xff]
    %v767 = vld [vmem:[#allocation7 + $0x440] sm:$0xff]
    %v768 = vld [vmem:[#allocation7 + $0x448] sm:$0xff]
    %v769 = vld [vmem:[#allocation7 + $0x450] sm:$0xff]
    %v770 = vld [vmem:[#allocation7 + $0x458] sm:$0xff]
    %v771 = vld [vmem:[#allocation7 + $0x460] sm:$0xff]
    %v772 = vld [vmem:[#allocation7 + $0x468] sm:$0xff]
    %v773 = vld [vmem:[#allocation7 + $0x470] sm:$0xff]
    %v774 = vld [vmem:[#allocation7 + $0x478] sm:$0xff]
    %v775 = vld [vmem:[#allocation7 + $0x480] sm:$0xff]
    %v776 = vld [vmem:[#allocation7 + $0x488] sm:$0xff]
    %v777 = vld [vmem:[#allocation7 + $0x490] sm:$0xff]
    %v778 = vld [vmem:[#allocation7 + $0x498] sm:$0xff]
    %v779 = vld [vmem:[#allocation7 + $0x4a0] sm:$0xff]
    %v780 = vld [vmem:[#allocation7 + $0x4a8] sm:$0xff]
    %v781 = vld [vmem:[#allocation7 + $0x4b0] sm:$0xff]
    %v782 = vld [vmem:[#allocation7 + $0x4b8] sm:$0xff]
    %v783 = vld [vmem:[#allocation7 + $0x4c0] sm:$0xff]
    %v784 = vld [vmem:[#allocation7 + $0x4c8] sm:$0xff]
    %v785 = vld [vmem:[#allocation7 + $0x4d0] sm:$0xff]
    %v786 = vld [vmem:[#allocation7 + $0x4d8] sm:$0xff]
    %v787 = vld [vmem:[#allocation7 + $0x4e0] sm:$0xff]
    %v788 = vld [vmem:[#allocation7 + $0x4e8] sm:$0xff]
    %v789 = vld [vmem:[#allocation7 + $0x4f0] sm:$0xff]
    %v790 = vld [vmem:[#allocation7 + $0x4f8] sm:$0xff]
    %v791 = vld [vmem:[#allocation7 + $0x500] sm:$0xff]
    %v792 = vld [vmem:[#allocation7 + $0x508] sm:$0xff]
    %v793 = vld [vmem:[#allocation7 + $0x510] sm:$0xff]
    %v794 = vld [vmem:[#allocation7 + $0x518] sm:$0xff]
    %v795 = vld [vmem:[#allocation7 + $0x520] sm:$0xff]
    %v796 = vld [vmem:[#allocation7 + $0x528] sm:$0xff]
    %v797 = vld [vmem:[#allocation7 + $0x530] sm:$0xff]
    %v798 = vld [vmem:[#allocation7 + $0x538] sm:$0xff]
    %v799 = vld [vmem:[#allocation7 + $0x540] sm:$0xff]
    %v800 = vld [vmem:[#allocation7 + $0x548] sm:$0xff]
    %v801 = vld [vmem:[#allocation7 + $0x550] sm:$0xff]
    %v802 = vld [vmem:[#allocation7 + $0x558] sm:$0xff]
    %v803 = vld [vmem:[#allocation7 + $0x560] sm:$0xff]
    %v804 = vld [vmem:[#allocation7 + $0x568] sm:$0xff]
    %v805 = vld [vmem:[#allocation7 + $0x570] sm:$0xff]
    %v806 = vld [vmem:[#allocation7 + $0x578] sm:$0xff]
    %v807 = vld [vmem:[#allocation7 + $0x580] sm:$0xff]
    %v808 = vld [vmem:[#allocation7 + $0x588] sm:$0xff]
    %v809 = vld [vmem:[#allocation7 + $0x590] sm:$0xff]
    %v810 = vld [vmem:[#allocation7 + $0x598] sm:$0xff]
    %v811 = vld [vmem:[#allocation7 + $0x5a0] sm:$0xff]
    %v812 = vld [vmem:[#allocation7 + $0x5a8] sm:$0xff]
    %v813 = vld [vmem:[#allocation7 + $0x5b0] sm:$0xff]
    %v814 = vld [vmem:[#allocation7 + $0x5b8] sm:$0xff]
    %v815 = vld [vmem:[#allocation7 + $0x5c0] sm:$0xff]
    %v816 = vld [vmem:[#allocation7 + $0x5c8] sm:$0xff]
    %v817 = vld [vmem:[#allocation7 + $0x5d0] sm:$0xff]
    %v818 = vld [vmem:[#allocation7 + $0x5d8] sm:$0xff]
    %v819 = vld [vmem:[#allocation7 + $0x5e0] sm:$0xff]
    %v820 = vld [vmem:[#allocation7 + $0x5e8] sm:$0xff]
    %v821 = vld [vmem:[#allocation7 + $0x5f0] sm:$0xff]
    %v822 = vld [vmem:[#allocation7 + $0x5f8] sm:$0xff]
    %v823 = vld [vmem:[#allocation7 + $0x600] sm:$0xff]
    %v824 = vld [vmem:[#allocation7 + $0x608] sm:$0xff]
    %v825 = vld [vmem:[#allocation7 + $0x610] sm:$0xff]
    %v826 = vld [vmem:[#allocation7 + $0x618] sm:$0xff]
    %v827 = vld [vmem:[#allocation7 + $0x620] sm:$0xff]
    %v828 = vld [vmem:[#allocation7 + $0x628] sm:$0xff]
    %v829 = vld [vmem:[#allocation7 + $0x630] sm:$0xff]
    %v830 = vld [vmem:[#allocation7 + $0x638] sm:$0xff]
    %v831 = vld [vmem:[#allocation7 + $0x640] sm:$0xff]
    %v832 = vld [vmem:[#allocation7 + $0x648] sm:$0xff]
    %v833 = vld [vmem:[#allocation7 + $0x650] sm:$0xff]
    %v834 = vld [vmem:[#allocation7 + $0x658] sm:$0xff]
    %v835 = vld [vmem:[#allocation7 + $0x660] sm:$0xff]
    %v836 = vld [vmem:[#allocation7 + $0x668] sm:$0xff]
    %v837 = vld [vmem:[#allocation7 + $0x670] sm:$0xff]
    %v838 = vld [vmem:[#allocation7 + $0x678] sm:$0xff]
    %v839 = vld [vmem:[#allocation7 + $0x680] sm:$0xff]
    %v840 = vld [vmem:[#allocation7 + $0x688] sm:$0xff]
    %v841 = vld [vmem:[#allocation7 + $0x690] sm:$0xff]
    %v842 = vld [vmem:[#allocation7 + $0x698] sm:$0xff]
    %v843 = vld [vmem:[#allocation7 + $0x6a0] sm:$0xff]
    %v844 = vld [vmem:[#allocation7 + $0x6a8] sm:$0xff]
    %v845 = vld [vmem:[#allocation7 + $0x6b0] sm:$0xff]
    %v846 = vld [vmem:[#allocation7 + $0x6b8] sm:$0xff]
    %v847 = vld [vmem:[#allocation7 + $0x6c0] sm:$0xff]
    %v848 = vld [vmem:[#allocation7 + $0x6c8] sm:$0xff]
    %v849 = vld [vmem:[#allocation7 + $0x6d0] sm:$0xff]
    %v850 = vld [vmem:[#allocation7 + $0x6d8] sm:$0xff]
    %v851 = vld [vmem:[#allocation7 + $0x6e0] sm:$0xff]
    %v852 = vld [vmem:[#allocation7 + $0x6e8] sm:$0xff]
    %v853 = vld [vmem:[#allocation7 + $0x6f0] sm:$0xff]
    %v854 = vld [vmem:[#allocation7 + $0x6f8] sm:$0xff]
    %v855 = vld [vmem:[#allocation7 + $0x700] sm:$0xff]
    %v856 = vld [vmem:[#allocation7 + $0x708] sm:$0xff]
    %v857 = vld [vmem:[#allocation7 + $0x710] sm:$0xff]
    %v858 = vld [vmem:[#allocation7 + $0x718] sm:$0xff]
    %v859 = vld [vmem:[#allocation7 + $0x720] sm:$0xff]
    %v860 = vld [vmem:[#allocation7 + $0x728] sm:$0xff]
    %v861 = vld [vmem:[#allocation7 + $0x730] sm:$0xff]
    %v862 = vld [vmem:[#allocation7 + $0x738] sm:$0xff]
    %v863 = vld [vmem:[#allocation7 + $0x740] sm:$0xff]
    %v864 = vld [vmem:[#allocation7 + $0x748] sm:$0xff]
    %v865 = vld [vmem:[#allocation7 + $0x750] sm:$0xff]
    %v866 = vld [vmem:[#allocation7 + $0x758] sm:$0xff]
    %v867 = vld [vmem:[#allocation7 + $0x760] sm:$0xff]
    %v868 = vld [vmem:[#allocation7 + $0x768] sm:$0xff]
    %v869 = vld [vmem:[#allocation7 + $0x770] sm:$0xff]
    %v870 = vld [vmem:[#allocation7 + $0x778] sm:$0xff]
    %v871 = vld [vmem:[#allocation7 + $0x780] sm:$0xff]
    %v872 = vld [vmem:[#allocation7 + $0x788] sm:$0xff]
    %v873 = vld [vmem:[#allocation7 + $0x790] sm:$0xff]
    %v874 = vld [vmem:[#allocation7 + $0x798] sm:$0xff]
    %v875 = vld [vmem:[#allocation7 + $0x7a0] sm:$0xff]
    %v876 = vld [vmem:[#allocation7 + $0x7a8] sm:$0xff]
    %v877 = vld [vmem:[#allocation7 + $0x7b0] sm:$0xff]
    %v878 = vld [vmem:[#allocation7 + $0x7b8] sm:$0xff]
    %v879 = vld [vmem:[#allocation7 + $0x7c0] sm:$0xff]
    %v880 = vld [vmem:[#allocation7 + $0x7c8] sm:$0xff]
    %v881 = vld [vmem:[#allocation7 + $0x7d0] sm:$0xff]
    %v882 = vld [vmem:[#allocation7 + $0x7d8] sm:$0xff]
    %v883 = vld [vmem:[#allocation7 + $0x7e0] sm:$0xff]
    %v884 = vld [vmem:[#allocation7 + $0x7e8] sm:$0xff]
    %v885 = vld [vmem:[#allocation7 + $0x7f0] sm:$0xff]
    %v886 = vld [vmem:[#allocation7 + $0x7f8] sm:$0xff]
    %v887 = vld [vmem:[%s5] sm:$0xf]
    %v889 = vperm.slane %v887, 0
    %v890 = vperm.slane %v887, 1
    %v891 = vperm.slane %v887, 2
    %v892 = vperm.slane %v887, 3
    %897 = vmatpush.msra.mxu0 %v691
    %898 = vmatpush.msra.mxu0 %v687
    %899 = vmatpush.msra.mxu0 %v683
    %900 = vmatpush.msra.mxu0 %v679
    %901 = vmatpush.msra.mxu0 %v675
    %902 = vmatpush.msra.mxu0 %v671
    %903 = vmatpush.msra.mxu0 %v667
    %904 = vmatpush.msra.mxu0 %v663
    %905 = vmatpush.msra.mxu0 %v659
    %906 = vmatpush.msra.mxu0 %v655
    %907 = vmatpush.msra.mxu0 %v651
    %908 = vmatpush.msra.mxu0 %v647
    %909 = vmatpush.msra.mxu0 %v643
    %910 = vmatpush.msra.mxu0 %v639
    %911 = vmatpush.msra.mxu0 %v635
    %912 = vmatpush.msra.mxu0 %v631
    %913 = vmatmul.f32.gmra.mxu0 %v627
    %v914 = vpop.f32.mrf.mxu0
    %v915 = vadd.f32 %v889, %v914
    %916 = vdwg.mxu0
    %917 = vmatpush.msra.mxu0 %v755
    %918 = vmatpush.msra.mxu0 %v751
    %919 = vmatpush.msra.mxu0 %v747
    %920 = vmatpush.msra.mxu0 %v743
    %921 = vmatpush.msra.mxu0 %v739
    %922 = vmatpush.msra.mxu0 %v735
    %923 = vmatpush.msra.mxu0 %v731
    %924 = vmatpush.msra.mxu0 %v727
    %925 = vmatpush.msra.mxu0 %v723
    %926 = vmatpush.msra.mxu0 %v719
    %927 = vmatpush.msra.mxu0 %v715
    %928 = vmatpush.msra.mxu0 %v711
    %929 = vmatpush.msra.mxu0 %v707
    %930 = vmatpush.msra.mxu0 %v703
    %931 = vmatpush.msra.mxu0 %v699
    %932 = vmatpush.msra.mxu0 %v695
    %933 = vmatmul.f32.gmra.mxu0 %v628
    %v934 = vpop.f32.mrf.mxu0
    %v935 = vadd.f32 %v915, %v934
    %936 = vdwg.mxu0
    %937 = vmatpush.msra.mxu0 %v819
    %938 = vmatpush.msra.mxu0 %v815
    %939 = vmatpush.msra.mxu0 %v811
    %940 = vmatpush.msra.mxu0 %v807
    %941 = vmatpush.msra.mxu0 %v803
    %942 = vmatpush.msra.mxu0 %v799
    %943 = vmatpush.msra.mxu0 %v795
    %944 = vmatpush.msra.mxu0 %v791
    %945 = vmatpush.msra.mxu0 %v787
    %946 = vmatpush.msra.mxu0 %v783
    %947 = vmatpush.msra.mxu0 %v779
    %948 = vmatpush.msra.mxu0 %v775
    %949 = vmatpush.msra.mxu0 %v771
    %950 = vmatpush.msra.mxu0 %v767
    %951 = vmatpush.msra.mxu0 %v763
    %952 = vmatpush.msra.mxu0 %v759
    %953 = vmatmul.f32.gmra.mxu0 %v629
    %v954 = vpop.f32.mrf.mxu0
    %v955 = vadd.f32 %v935, %v954
    %956 = vdwg.mxu0
    %957 = vmatpush.msra.mxu0 %v883
    %958 = vmatpush.msra.mxu0 %v879
    %959 = vmatpush.msra.mxu0 %v875
    %960 = vmatpush.msra.mxu0 %v871
    %961 = vmatpush.msra.mxu0 %v867
    %962 = vmatpush.msra.mxu0 %v863
    %963 = vmatpush.msra.mxu0 %v859
    %964 = vmatpush.msra.mxu0 %v855
    %965 = vmatpush.msra.mxu0 %v851
    %966 = vmatpush.msra.mxu0 %v847
    %967 = vmatpush.msra.mxu0 %v843
    %968 = vmatpush.msra.mxu0 %v839
    %969 = vmatpush.msra.mxu0 %v835
    %970 = vmatpush.msra.mxu0 %v831
    %971 = vmatpush.msra.mxu0 %v827
    %972 = vmatpush.msra.mxu0 %v823
    %973 = vmatmul.f32.gmra.mxu0 %v630
    %v974 = vpop.f32.mrf.mxu0
    %v975 = vadd.f32 %v955, %v974
    %976 = vdwg.mxu0
    %977 = vmatpush.msra.mxu0 %v692
    %978 = vmatpush.msra.mxu0 %v688
    %979 = vmatpush.msra.mxu0 %v684
    %980 = vmatpush.msra.mxu0 %v680
    %981 = vmatpush.msra.mxu0 %v676
    %982 = vmatpush.msra.mxu0 %v672
    %983 = vmatpush.msra.mxu0 %v668
    %984 = vmatpush.msra.mxu0 %v664
    %985 = vmatpush.msra.mxu0 %v660
    %986 = vmatpush.msra.mxu0 %v656
    %987 = vmatpush.msra.mxu0 %v652
    %988 = vmatpush.msra.mxu0 %v648
    %989 = vmatpush.msra.mxu0 %v644
    %990 = vmatpush.msra.mxu0 %v640
    %991 = vmatpush.msra.mxu0 %v636
    %992 = vmatpush.msra.mxu0 %v632
    %993 = vmatmul.f32.gmra.mxu0 %v627
    %v994 = vpop.f32.mrf.mxu0
    %v995 = vadd.f32 %v890, %v994
    %996 = vdwg.mxu0
    %997 = vmatpush.msra.mxu0 %v756
    %998 = vmatpush.msra.mxu0 %v752
    %999 = vmatpush.msra.mxu0 %v748
    %1000 = vmatpush.msra.mxu0 %v744
    %1001 = vmatpush.msra.mxu0 %v740
    %1002 = vmatpush.msra.mxu0 %v736
    %1003 = vmatpush.msra.mxu0 %v732
    %1004 = vmatpush.msra.mxu0 %v728
    %1005 = vmatpush.msra.mxu0 %v724
    %1006 = vmatpush.msra.mxu0 %v720
    %1007 = vmatpush.msra.mxu0 %v716
    %1008 = vmatpush.msra.mxu0 %v712
    %1009 = vmatpush.msra.mxu0 %v708
    %1010 = vmatpush.msra.mxu0 %v704
    %1011 = vmatpush.msra.mxu0 %v700
    %1012 = vmatpush.msra.mxu0 %v696
    %1013 = vmatmul.f32.gmra.mxu0 %v628
    %v1014 = vpop.f32.mrf.mxu0
    %v1015 = vadd.f32 %v995, %v1014
    %1016 = vdwg.mxu0
    %1017 = vmatpush.msra.mxu0 %v820
    %1018 = vmatpush.msra.mxu0 %v816
    %1019 = vmatpush.msra.mxu0 %v812
    %1020 = vmatpush.msra.mxu0 %v808
    %1021 = vmatpush.msra.mxu0 %v804
    %1022 = vmatpush.msra.mxu0 %v800
    %1023 = vmatpush.msra.mxu0 %v796
    %1024 = vmatpush.msra.mxu0 %v792
    %1025 = vmatpush.msra.mxu0 %v788
    %1026 = vmatpush.msra.mxu0 %v784
    %1027 = vmatpush.msra.mxu0 %v780
    %1028 = vmatpush.msra.mxu0 %v776
    %1029 = vmatpush.msra.mxu0 %v772
    %1030 = vmatpush.msra.mxu0 %v768
    %1031 = vmatpush.msra.mxu0 %v764
    %1032 = vmatpush.msra.mxu0 %v760
    %1033 = vmatmul.f32.gmra.mxu0 %v629
    %v1034 = vpop.f32.mrf.mxu0
    %v1035 = vadd.f32 %v1015, %v1034
    %1036 = vdwg.mxu0
    %1037 = vmatpush.msra.mxu0 %v884
    %1038 = vmatpush.msra.mxu0 %v880
    %1039 = vmatpush.msra.mxu0 %v876
    %1040 = vmatpush.msra.mxu0 %v872
    %1041 = vmatpush.msra.mxu0 %v868
    %1042 = vmatpush.msra.mxu0 %v864
    %1043 = vmatpush.msra.mxu0 %v860
    %1044 = vmatpush.msra.mxu0 %v856
    %1045 = vmatpush.msra.mxu0 %v852
    %1046 = vmatpush.msra.mxu0 %v848
    %1047 = vmatpush.msra.mxu0 %v844
    %1048 = vmatpush.msra.mxu0 %v840
    %1049 = vmatpush.msra.mxu0 %v836
    %1050 = vmatpush.msra.mxu0 %v832
    %1051 = vmatpush.msra.mxu0 %v828
    %1052 = vmatpush.msra.mxu0 %v824
    %1053 = vmatmul.f32.gmra.mxu0 %v630
    %v1054 = vpop.f32.mrf.mxu0
    %v1055 = vadd.f32 %v1035, %v1054
    %1056 = vdwg.mxu0
    %1057 = vmatpush.msra.mxu0 %v693
    %1058 = vmatpush.msra.mxu0 %v689
    %1059 = vmatpush.msra.mxu0 %v685
    %1060 = vmatpush.msra.mxu0 %v681
    %1061 = vmatpush.msra.mxu0 %v677
    %1062 = vmatpush.msra.mxu0 %v673
    %1063 = vmatpush.msra.mxu0 %v669
    %1064 = vmatpush.msra.mxu0 %v665
    %1065 = vmatpush.msra.mxu0 %v661
    %1066 = vmatpush.msra.mxu0 %v657
    %1067 = vmatpush.msra.mxu0 %v653
    %1068 = vmatpush.msra.mxu0 %v649
    %1069 = vmatpush.msra.mxu0 %v645
    %1070 = vmatpush.msra.mxu0 %v641
    %1071 = vmatpush.msra.mxu0 %v637
    %1072 = vmatpush.msra.mxu0 %v633
    %1073 = vmatmul.f32.gmra.mxu0 %v627
    %v1074 = vpop.f32.mrf.mxu0
    %v1075 = vadd.f32 %v891, %v1074
    %1076 = vdwg.mxu0
    %1077 = vmatpush.msra.mxu0 %v757
    %1078 = vmatpush.msra.mxu0 %v753
    %1079 = vmatpush.msra.mxu0 %v749
    %1080 = vmatpush.msra.mxu0 %v745
    %1081 = vmatpush.msra.mxu0 %v741
    %1082 = vmatpush.msra.mxu0 %v737
    %1083 = vmatpush.msra.mxu0 %v733
    %1084 = vmatpush.msra.mxu0 %v729
    %1085 = vmatpush.msra.mxu0 %v725
    %1086 = vmatpush.msra.mxu0 %v721
    %1087 = vmatpush.msra.mxu0 %v717
    %1088 = vmatpush.msra.mxu0 %v713
    %1089 = vmatpush.msra.mxu0 %v709
    %1090 = vmatpush.msra.mxu0 %v705
    %1091 = vmatpush.msra.mxu0 %v701
    %1092 = vmatpush.msra.mxu0 %v697
    %1093 = vmatmul.f32.gmra.mxu0 %v628
    %v1094 = vpop.f32.mrf.mxu0
    %v1095 = vadd.f32 %v1075, %v1094
    %1096 = vdwg.mxu0
    %1097 = vmatpush.msra.mxu0 %v821
    %1098 = vmatpush.msra.mxu0 %v817
    %1099 = vmatpush.msra.mxu0 %v813
    %1100 = vmatpush.msra.mxu0 %v809
    %1101 = vmatpush.msra.mxu0 %v805
    %1102 = vmatpush.msra.mxu0 %v801
    %1103 = vmatpush.msra.mxu0 %v797
    %1104 = vmatpush.msra.mxu0 %v793
    %1105 = vmatpush.msra.mxu0 %v789
    %1106 = vmatpush.msra.mxu0 %v785
    %1107 = vmatpush.msra.mxu0 %v781
    %1108 = vmatpush.msra.mxu0 %v777
    %1109 = vmatpush.msra.mxu0 %v773
    %1110 = vmatpush.msra.mxu0 %v769
    %1111 = vmatpush.msra.mxu0 %v765
    %1112 = vmatpush.msra.mxu0 %v761
    %1113 = vmatmul.f32.gmra.mxu0 %v629
    %v1114 = vpop.f32.mrf.mxu0
    %v1115 = vadd.f32 %v1095, %v1114
    %1116 = vdwg.mxu0
    %1117 = vmatpush.msra.mxu0 %v885
    %1118 = vmatpush.msra.mxu0 %v881
    %1119 = vmatpush.msra.mxu0 %v877
    %1120 = vmatpush.msra.mxu0 %v873
    %1121 = vmatpush.msra.mxu0 %v869
    %1122 = vmatpush.msra.mxu0 %v865
    %1123 = vmatpush.msra.mxu0 %v861
    %1124 = vmatpush.msra.mxu0 %v857
    %1125 = vmatpush.msra.mxu0 %v853
    %1126 = vmatpush.msra.mxu0 %v849
    %1127 = vmatpush.msra.mxu0 %v845
    %1128 = vmatpush.msra.mxu0 %v841
    %1129 = vmatpush.msra.mxu0 %v837
    %1130 = vmatpush.msra.mxu0 %v833
    %1131 = vmatpush.msra.mxu0 %v829
    %1132 = vmatpush.msra.mxu0 %v825
    %1133 = vmatmul.f32.gmra.mxu0 %v630
    %v1134 = vpop.f32.mrf.mxu0
    %v1135 = vadd.f32 %v1115, %v1134
    %1136 = vdwg.mxu0
    %1137 = vmatpush.msra.mxu0 %v694
    %1138 = vmatpush.msra.mxu0 %v690
    %1139 = vmatpush.msra.mxu0 %v686
    %1140 = vmatpush.msra.mxu0 %v682
    %1141 = vmatpush.msra.mxu0 %v678
    %1142 = vmatpush.msra.mxu0 %v674
    %1143 = vmatpush.msra.mxu0 %v670
    %1144 = vmatpush.msra.mxu0 %v666
    %1145 = vmatpush.msra.mxu0 %v662
    %1146 = vmatpush.msra.mxu0 %v658
    %1147 = vmatpush.msra.mxu0 %v654
    %1148 = vmatpush.msra.mxu0 %v650
    %1149 = vmatpush.msra.mxu0 %v646
    %1150 = vmatpush.msra.mxu0 %v642
    %1151 = vmatpush.msra.mxu0 %v638
    %1152 = vmatpush.msra.mxu0 %v634
    %1153 = vmatmul.f32.gmra.mxu0 %v627
    %v1154 = vpop.f32.mrf.mxu0
    %v1155 = vadd.f32 %v892, %v1154
    %1156 = vdwg.mxu0
    %1157 = vmatpush.msra.mxu0 %v758
    %1158 = vmatpush.msra.mxu0 %v754
    %1159 = vmatpush.msra.mxu0 %v750
    %1160 = vmatpush.msra.mxu0 %v746
    %1161 = vmatpush.msra.mxu0 %v742
    %1162 = vmatpush.msra.mxu0 %v738
    %1163 = vmatpush.msra.mxu0 %v734
    %1164 = vmatpush.msra.mxu0 %v730
    %1165 = vmatpush.msra.mxu0 %v726
    %1166 = vmatpush.msra.mxu0 %v722
    %1167 = vmatpush.msra.mxu0 %v718
    %1168 = vmatpush.msra.mxu0 %v714
    %1169 = vmatpush.msra.mxu0 %v710
    %1170 = vmatpush.msra.mxu0 %v706
    %1171 = vmatpush.msra.mxu0 %v702
    %1172 = vmatpush.msra.mxu0 %v698
    %1173 = vmatmul.f32.gmra.mxu0 %v628
    %v1174 = vpop.f32.mrf.mxu0
    %v1175 = vadd.f32 %v1155, %v1174
    %1176 = vdwg.mxu0
    %1177 = vmatpush.msra.mxu0 %v822
    %1178 = vmatpush.msra.mxu0 %v818
    %1179 = vmatpush.msra.mxu0 %v814
    %1180 = vmatpush.msra.mxu0 %v810
    %1181 = vmatpush.msra.mxu0 %v806
    %1182 = vmatpush.msra.mxu0 %v802
    %1183 = vmatpush.msra.mxu0 %v798
    %1184 = vmatpush.msra.mxu0 %v794
    %1185 = vmatpush.msra.mxu0 %v790
    %1186 = vmatpush.msra.mxu0 %v786
    %1187 = vmatpush.msra.mxu0 %v782
    %1188 = vmatpush.msra.mxu0 %v778
    %1189 = vmatpush.msra.mxu0 %v774
    %1190 = vmatpush.msra.mxu0 %v770
    %1191 = vmatpush.msra.mxu0 %v766
    %1192 = vmatpush.msra.mxu0 %v762
    %1193 = vmatmul.f32.gmra.mxu0 %v629
    %v1194 = vpop.f32.mrf.mxu0
    %v1195 = vadd.f32 %v1175, %v1194
    %1196 = vdwg.mxu0
    %1197 = vmatpush.msra.mxu0 %v886
    %1198 = vmatpush.msra.mxu0 %v882
    %1199 = vmatpush.msra.mxu0 %v878
    %1200 = vmatpush.msra.mxu0 %v874
    %1201 = vmatpush.msra.mxu0 %v870
    %1202 = vmatpush.msra.mxu0 %v866
    %1203 = vmatpush.msra.mxu0 %v862
    %1204 = vmatpush.msra.mxu0 %v858
    %1205 = vmatpush.msra.mxu0 %v854
    %1206 = vmatpush.msra.mxu0 %v850
    %1207 = vmatpush.msra.mxu0 %v846
    %1208 = vmatpush.msra.mxu0 %v842
    %1209 = vmatpush.msra.mxu0 %v838
    %1210 = vmatpush.msra.mxu0 %v834
    %1211 = vmatpush.msra.mxu0 %v830
    %1212 = vmatpush.msra.mxu0 %v826
    %1213 = vmatmul.f32.gmra.mxu0 %v630
    %v1214 = vpop.f32.mrf.mxu0
    %v1215 = vadd.f32 %v1195, %v1214
    %1216 = vdwg.mxu0
    %1217 = vst [vmem:[#allocation8] sm:$0xff] %v975
    %1218 = vst [vmem:[#allocation8 + $0x8] sm:$0xff] %v1055
    %1219 = vst [vmem:[#allocation8 + $0x10] sm:$0xff] %v1135
    %1220 = vst [vmem:[#allocation8 + $0x18] sm:$0xff] %v1215
    // Predicated region
    $region38: #{tpu_custom_call.1} parent=1 // pred_check
      _
    $region39: #{tpu_custom_call.1} parent=1 // pred_check_branch
      %1222 = sbr.rel (0) target = $region41
    $region40: #{tpu_custom_call.1} parent=1 // pred_region
      %1224 = vsyncadd [#allocation4], 0
      %s1226 = sshll.u32 [#allocation8], 4
      %s1227 = int_to_ptr.vmem [resolvable:$true] %s1226
      %s1228 = sshll.u32 %s6, 4
      %s1229 = int_to_ptr.hbm [resolvable:$true] %s1228
      %1231 = dma.vmem_to_hbm [thread:$0]  %s1227, 512, %s1229, [#allocation4]
    $region41: #{tpu_custom_call.1} parent=1 // pred_fallthru
      _
    // Predicated region
    $region42: #{tpu_custom_call.1} parent=1 // pred_check
      _
    $region43: #{tpu_custom_call.1} parent=1 // pred_check_branch
      %1233 = sbr.rel (0) target = $region45
    $region44: #{tpu_custom_call.1} parent=1 // pred_region
      %1235 = dma.done [#allocation4], 512
    $region45: #{tpu_custom_call.1} parent=1 // pred_fallthru
      _
    %1236 = vsyncpa [#allocation3], 1
    %1237 = vsyncpa [#allocation6], 1
    %1238 = vsyncpa [#allocation4], 1

</llo_original>
